<compile_context>
chip_gen: v6e
topology: v6e:2x2x1
jax: 0.10.0
libtpu: 0.0.40
codegen_flags: <defaults>
</compile_context>

<pallas_src>
import jax
import jax.numpy as jnp
from jax.experimental import pallas as pl
from jax.experimental.pallas import tpu as pltpu

_LANE = 128
_BM = 256  # batch tile for large B (matches 2x256^2 MXU on v6e/v7x)


def _round_up(n, m):
    return ((n + m - 1) // m) * m


# ----------------------------- Pallas kernel -------------------------------

def conv_ccf_fused_kernel(x_ref, wf_ref, bf_ref, w1_ref, b1_ref, w2_ref,
                          b2_ref, o_ref):
    """Fused Conv_CCF forward for one batch tile (everything in VMEM).

    x_ref:  (bm, d_in)        flattened NCHW input tile, float32
    wf_ref: (d_in, d_feat_p)  all BCBLearner projections, class-major cols, bf16
    bf_ref: (1, d_feat_p)     f32 feature bias (zero in padded columns)
    w1_ref: (d_feat_p, 128)   classifier fc1 weight (zero pad rows/cols), bf16
    b1_ref: (1, 128)          f32 (zero in padded columns)
    w2_ref: (128, n_out_p)    classifier fc2 weight (zero pad rows/cols), bf16
    b2_ref: (1, n_out_p)      f32 (zero in padded columns)
    o_ref:  (bm, n_out_p)     f32 logits, lane-dense padded slab
    """
    # Cast x to the MXU compute dtype in-kernel (rides the VPU slot under MXU
    # slack; avoids a separate XLA convert + extra HBM round trip).
    x = x_ref[...].astype(wf_ref.dtype)

    # V = cat_i ReLU(x @ Wf_i + bf_i): one wide MXU matmul, f32 accumulation.
    v = jnp.dot(x, wf_ref[...], preferred_element_type=jnp.float32)
    v = jnp.maximum(v + bf_ref[...], 0.0)

    # classifier: Linear -> ReLU -> Linear, never leaves VMEM.
    h = jnp.dot(v.astype(w1_ref.dtype), w1_ref[...],
                preferred_element_type=jnp.float32)
    h = jnp.maximum(h + b1_ref[...], 0.0)
    o = jnp.dot(h.astype(w2_ref.dtype), w2_ref[...],
                preferred_element_type=jnp.float32)
    o_ref[...] = o + b2_ref[...]


# --------------------- one-time parameter packing --------------------------

def pack_params(params, compute_dtype=jnp.bfloat16):
    """Pack raw f32 params into the kernel's padded bf16 layout (call once).

    Column c*d_per + p of the packed wf corresponds to wf[c, :, p], matching
    torch.cat((F1, ..., Fn), dim=1).  Zero-padding scheme is exact:
    padded V cols = ReLU(0+0) = 0 hit zero w1 rows; padded h cols = 0 hit zero
    w2 rows; padded logits are sliced off in the wrapper.
    """
    wf, bf = params["wf"], params["bf"]
    w1, b1 = params["w1"], params["b1"]
    w2, b2 = params["w2"], params["b2"]

    num_classes, d_in, d_per = wf.shape
    d_feat = num_classes * d_per
    d_feat_p = _round_up(d_feat, _LANE)
    d_hid = w1.shape[1]
    d_hid_p = _round_up(d_hid, _LANE)   # 64 -> 128: lane-dense hidden
    n_out = w2.shape[1]
    n_out_p = _round_up(n_out, _LANE)

    wf_all = jnp.transpose(wf, (1, 0, 2)).reshape(d_in, d_feat)
    bf_all = bf.reshape(1, d_feat)

    wf_p = jnp.pad(wf_all, ((0, 0), (0, d_feat_p - d_feat)))
    bf_p = jnp.pad(bf_all, ((0, 0), (0, d_feat_p - d_feat)))
    w1_p = jnp.pad(w1, ((0, d_feat_p - d_feat), (0, d_hid_p - d_hid)))
    b1_p = jnp.pad(b1, ((0, 0), (0, d_hid_p - d_hid)))
    w2_p = jnp.pad(w2, ((0, d_hid_p - d_hid), (0, n_out_p - n_out)))
    b2_p = jnp.pad(b2, ((0, 0), (0, n_out_p - n_out)))

    return {
        "wf": wf_p.astype(compute_dtype),
        "bf": bf_p.astype(jnp.float32),
        "w1": w1_p.astype(compute_dtype),
        "b1": b1_p.astype(jnp.float32),
        "w2": w2_p.astype(compute_dtype),
        "b2": b2_p.astype(jnp.float32),
    }


# ------------------------------- wrapper -----------------------------------

def conv_ccf_forward(x, packed, n_out):
    """Forward pass of Conv_CCF.

    x:      (B, C, H, W) float32 (NCHW, like PyTorch).
    packed: dict from pack_params() (already padded / bf16).
    n_out:  static number of classes (true logit width).
    Returns: (B, n_out) float32 logits.
    """
    wf, bf = packed["wf"], packed["bf"]
    w1, b1 = packed["w1"], packed["b1"]
    w2, b2 = packed["w2"], packed["b2"]

    B = x.shape[0]
    x_flat = x.reshape(B, -1).astype(jnp.float32)  # glue: NCHW -> (B, C*H*W)
    d_in = x_flat.shape[1]
    d_feat_p = wf.shape[1]
    d_hid_p = w1.shape[1]
    n_out_p = w2.shape[1]

    # Batch tiling: MXU-matched tile for large B; one whole-B block otherwise
    # (block == full array dim bypasses the 8-sublane divisibility rule).
    if B > _BM:
        bm = _BM
        b_p = _round_up(B, bm)
    else:
        bm = B
        b_p = B
    if b_p != B:
        x_flat = jnp.pad(x_flat, ((0, b_p - B), (0, 0)))

    grid = (b_p // bm,)

    out_p = pl.pallas_call(
        conv_ccf_fused_kernel,
        grid=grid,
        in_specs=[
            # x: blocked over batch -> double-buffered DMA overlaps matmuls.
            pl.BlockSpec((bm, d_in), lambda i: (i, 0)),
            # weights / biases: constant index_map -> VMEM-resident, DMA'd once.
            pl.BlockSpec((d_in, d_feat_p), lambda i: (0, 0)),
            pl.BlockSpec((1, d_feat_p), lambda i: (0, 0)),
            pl.BlockSpec((d_feat_p, d_hid_p), lambda i: (0, 0)),
            pl.BlockSpec((1, d_hid_p), lambda i: (0, 0)),
            pl.BlockSpec((d_hid_p, n_out_p), lambda i: (0, 0)),
            pl.BlockSpec((1, n_out_p), lambda i: (0, 0)),
        ],
        out_specs=pl.BlockSpec((bm, n_out_p), lambda i: (i, 0)),
        out_shape=jax.ShapeDtypeStruct((b_p, n_out_p), jnp.float32),
        compiler_params=pltpu.CompilerParams(
            # Independent batch tiles: shard across v7x's two TensorCores.
            dimension_semantics=("parallel",),
        ),
    )(x_flat, wf, bf, w1, b1, w2, b2)

    return out_p[:B, :n_out]


# ------------------------ deterministic parameters --------------------------

def init_params(key, num_CKs, num_classes, d_in):
    d_per = 16 * num_CKs                    # per-learner feature width
    d_feat = d_per * num_classes            # classifier input width
    ks = jax.random.split(key, 6)
    scale_f = 1.0 / jnp.sqrt(d_in)
    scale_1 = 1.0 / jnp.sqrt(d_feat)
    scale_2 = 1.0 / jnp.sqrt(64)
    return {
        "wf": (jax.random.normal(ks[0], (num_classes, d_in, d_per), jnp.float32)
               * scale_f),
        "bf": (jax.random.normal(ks[1], (num_classes, 1, d_per), jnp.float32)
               * scale_f),
        "w1": jax.random.normal(ks[2], (d_feat, 64), jnp.float32) * scale_1,
        "b1": jax.random.normal(ks[3], (1, 64), jnp.float32) * scale_1,
        "w2": jax.random.normal(ks[4], (64, num_classes), jnp.float32) * scale_2,
        "b2": jax.random.normal(ks[5], (1, num_classes), jnp.float32) * scale_2,
    }


if __name__ == "__main__":
    num_CKs = 4
    num_classes = 3
    B, C, H, W = 2, 4, 16, 16
    d_in = C * H * W

    key = jax.random.PRNGKey(0)
    kx, kp = jax.random.split(key)
    x = jax.random.normal(kx, (B, C, H, W), jnp.float32)
    raw_params = init_params(kp, num_CKs, num_classes, d_in)

    # One-time weight packing (transpose / pad / bf16 cast hoisted to init).
    packed = jax.tree_util.tree_map(jax.block_until_ready,
                                    pack_params(raw_params))

    fwd = jax.jit(conv_ccf_forward, static_argnames=("n_out",))
    out = fwd(x, packed, n_out=num_classes)
    out = jax.block_until_ready(out)
    assert out.shape == (B, num_classes), out.shape
    assert out.dtype == jnp.float32

    # Pure-JAX reference with the same bf16 matmul casting as the kernel.
    # NOTE: bf16 MXU operands deviate from a true f32 PyTorch Conv_CCF by
    # O(1e-2); this check validates the kernel against the same-precision math.
    cd = jnp.bfloat16
    x_flat = x.reshape(B, -1)
    wf_all = jnp.transpose(raw_params["wf"], (1, 0, 2)).reshape(d_in, -1)
    bf_all = raw_params["bf"].reshape(1, -1)
    V_ref = jnp.maximum(
        jnp.dot(x_flat.astype(cd), wf_all.astype(cd),
                preferred_element_type=jnp.float32) + bf_all, 0.0)
    h_ref = jnp.maximum(
        jnp.dot(V_ref.astype(cd), raw_params["w1"].astype(cd),
                preferred_element_type=jnp.float32) + raw_params["b1"], 0.0)
    out_ref = (jnp.dot(h_ref.astype(cd), raw_params["w2"].astype(cd),
                       preferred_element_type=jnp.float32) + raw_params["b2"])
    assert jnp.allclose(out, out_ref, atol=2e-2, rtol=2e-2), (
        jnp.max(jnp.abs(out - out_ref)))

    print("KERNEL_OK")
</pallas_src>

<mosaic_0001>
module attributes {stable_mosaic.version = 11 : i64} {
  func.func @conv_ccf_fused_kernel(%arg0: i32, %arg1: memref<2x1024xf32, #tpu.memory_space<vmem>>, %arg2: memref<1024x256xbf16, #tpu.memory_space<vmem>>, %arg3: memref<1x256xf32, #tpu.memory_space<vmem>>, %arg4: memref<256x128xbf16, #tpu.memory_space<vmem>>, %arg5: memref<1x128xf32, #tpu.memory_space<vmem>>, %arg6: memref<128x128xbf16, #tpu.memory_space<vmem>>, %arg7: memref<1x128xf32, #tpu.memory_space<vmem>>, %arg8: memref<2x128xf32, #tpu.memory_space<vmem>>) attributes {dimension_semantics = [#tpu.dimension_semantics<parallel>], iteration_bounds = array<i64: 1>, scalar_prefetch = 0 : i64, scratch_operands = 0 : i64, tpu.core_type = #tpu.core_type<tc>, window_params = [{transform_indices = @transform_0, window_bounds = array<i64: 2, 1024>}, {pipeline_mode = #tpu.pipeline_mode<synchronous>, transform_indices = @transform_1, window_bounds = array<i64: 1024, 256>}, {pipeline_mode = #tpu.pipeline_mode<synchronous>, transform_indices = @transform_2, window_bounds = array<i64: 1, 256>}, {pipeline_mode = #tpu.pipeline_mode<synchronous>, transform_indices = @transform_3, window_bounds = array<i64: 256, 128>}, {pipeline_mode = #tpu.pipeline_mode<synchronous>, transform_indices = @transform_4, window_bounds = array<i64: 1, 128>}, {pipeline_mode = #tpu.pipeline_mode<synchronous>, transform_indices = @transform_5, window_bounds = array<i64: 128, 128>}, {pipeline_mode = #tpu.pipeline_mode<synchronous>, transform_indices = @transform_6, window_bounds = array<i64: 1, 128>}, {transform_indices = @transform_7, window_bounds = array<i64: 2, 128>}]} {
    %c0 = arith.constant 0 : index
    %c0_0 = arith.constant 0 : index
    %0 = vector.load %arg1[%c0, %c0_0] : memref<2x1024xf32, #tpu.memory_space<vmem>>, vector<2x1024xf32>
    %1 = arith.truncf %0 : vector<2x1024xf32> to vector<2x1024xbf16>
    %c0_1 = arith.constant 0 : index
    %c0_2 = arith.constant 0 : index
    %2 = vector.load %arg2[%c0_1, %c0_2] : memref<1024x256xbf16, #tpu.memory_space<vmem>>, vector<1024x256xbf16>
    %cst = arith.constant dense<0.000000e+00> : vector<2x256xf32>
    %3 = tpu.matmul %1, %2, %cst {dimension_numbers = #tpu.dot_dimension_numbers<[1], [0], [0], [1], [0, 0, 1, 1], [], []>} : vector<2x1024xbf16>, vector<1024x256xbf16>, vector<2x256xf32> -> vector<2x256xf32>
    %c0_3 = arith.constant 0 : index
    %c0_4 = arith.constant 0 : index
    %4 = vector.load %arg3[%c0_3, %c0_4] : memref<1x256xf32, #tpu.memory_space<vmem>>, vector<1x256xf32>
    %5 = vector.broadcast %4 : vector<1x256xf32> to vector<2x256xf32>
    %6 = arith.addf %3, %5 : vector<2x256xf32>
    %cst_5 = arith.constant 0.000000e+00 : f32
    %7 = vector.broadcast %cst_5 : f32 to vector<2x256xf32>
    %8 = arith.maximumf %6, %7 : vector<2x256xf32>
    %9 = arith.truncf %8 : vector<2x256xf32> to vector<2x256xbf16>
    %c0_6 = arith.constant 0 : index
    %c0_7 = arith.constant 0 : index
    %10 = vector.load %arg4[%c0_6, %c0_7] : memref<256x128xbf16, #tpu.memory_space<vmem>>, vector<256x128xbf16>
    %cst_8 = arith.constant dense<0.000000e+00> : vector<2x128xf32>
    %11 = tpu.matmul %9, %10, %cst_8 {dimension_numbers = #tpu.dot_dimension_numbers<[1], [0], [0], [1], [0, 0, 1, 1], [], []>} : vector<2x256xbf16>, vector<256x128xbf16>, vector<2x128xf32> -> vector<2x128xf32>
    %c0_9 = arith.constant 0 : index
    %c0_10 = arith.constant 0 : index
    %12 = vector.load %arg5[%c0_9, %c0_10] : memref<1x128xf32, #tpu.memory_space<vmem>>, vector<1x128xf32>
    %13 = vector.broadcast %12 : vector<1x128xf32> to vector<2x128xf32>
    %14 = arith.addf %11, %13 : vector<2x128xf32>
    %cst_11 = arith.constant 0.000000e+00 : f32
    %15 = vector.broadcast %cst_11 : f32 to vector<2x128xf32>
    %16 = arith.maximumf %14, %15 : vector<2x128xf32>
    %17 = arith.truncf %16 : vector<2x128xf32> to vector<2x128xbf16>
    %c0_12 = arith.constant 0 : index
    %c0_13 = arith.constant 0 : index
    %18 = vector.load %arg6[%c0_12, %c0_13] : memref<128x128xbf16, #tpu.memory_space<vmem>>, vector<128x128xbf16>
    %cst_14 = arith.constant dense<0.000000e+00> : vector<2x128xf32>
    %19 = tpu.matmul %17, %18, %cst_14 {dimension_numbers = #tpu.dot_dimension_numbers<[1], [0], [0], [1], [0, 0, 1, 1], [], []>} : vector<2x128xbf16>, vector<128x128xbf16>, vector<2x128xf32> -> vector<2x128xf32>
    %c0_15 = arith.constant 0 : index
    %c0_16 = arith.constant 0 : index
    %20 = vector.load %arg7[%c0_15, %c0_16] : memref<1x128xf32, #tpu.memory_space<vmem>>, vector<1x128xf32>
    %21 = vector.broadcast %20 : vector<1x128xf32> to vector<2x128xf32>
    %22 = arith.addf %19, %21 : vector<2x128xf32>
    %c0_17 = arith.constant 0 : index
    %c0_18 = arith.constant 0 : index
    %23 = vector.load %arg8[%c0_17, %c0_18] : memref<2x128xf32, #tpu.memory_space<vmem>>, vector<2x128xf32>
    tpu.vector_store %arg8[%c0_17, %c0_18], %22 {strides = array<i32>} : memref<2x128xf32, #tpu.memory_space<vmem>>, vector<2x128xf32>,
    return
  }
  func.func @transform_0(%arg0: i32) -> (i32, i32) {
    %c0_i32 = arith.constant 0 : i32
    %c0_i32_0 = arith.constant 0 : i32
    return %arg0, %c0_i32 : i32, i32
  }
  func.func @transform_1(%arg0: i32) -> (i32, i32) {
    %c0_i32 = arith.constant 0 : i32
    %c0_i32_0 = arith.constant 0 : i32
    %c0_i32_1 = arith.constant 0 : i32
    return %c0_i32, %c0_i32_0 : i32, i32
  }
  func.func @transform_2(%arg0: i32) -> (i32, i32) {
    %c0_i32 = arith.constant 0 : i32
    %c0_i32_0 = arith.constant 0 : i32
    %c0_i32_1 = arith.constant 0 : i32
    return %c0_i32, %c0_i32_0 : i32, i32
  }
  func.func @transform_3(%arg0: i32) -> (i32, i32) {
    %c0_i32 = arith.constant 0 : i32
    %c0_i32_0 = arith.constant 0 : i32
    %c0_i32_1 = arith.constant 0 : i32
    return %c0_i32, %c0_i32_0 : i32, i32
  }
  func.func @transform_4(%arg0: i32) -> (i32, i32) {
    %c0_i32 = arith.constant 0 : i32
    %c0_i32_0 = arith.constant 0 : i32
    %c0_i32_1 = arith.constant 0 : i32
    return %c0_i32, %c0_i32_0 : i32, i32
  }
  func.func @transform_5(%arg0: i32) -> (i32, i32) {
    %c0_i32 = arith.constant 0 : i32
    %c0_i32_0 = arith.constant 0 : i32
    %c0_i32_1 = arith.constant 0 : i32
    return %c0_i32, %c0_i32_0 : i32, i32
  }
  func.func @transform_6(%arg0: i32) -> (i32, i32) {
    %c0_i32 = arith.constant 0 : i32
    %c0_i32_0 = arith.constant 0 : i32
    %c0_i32_1 = arith.constant 0 : i32
    return %c0_i32, %c0_i32_0 : i32, i32
  }
  func.func @transform_7(%arg0: i32) -> (i32, i32) {
    %c0_i32 = arith.constant 0 : i32
    %c0_i32_0 = arith.constant 0 : i32
    return %arg0, %c0_i32 : i32, i32
  }
}

</mosaic_0001>

<llo_original>
// kernel: conv_ccf_forward.1
$region0: #{conv_ccf_forward.1}
  #allocation0 [shape = 'u32[]', space=smem, size = 0x4, offset = 0x4, fixed_abs, tag = 'smem constant byte address 0x4 - core index']
  #allocation1 [shape = 'u32[144,128]{1,0:T(1,128)}', space=vmem, size = 0x12000, scoped, tag = 'internal scratch']
  %s0 = inlined_call_operand.vmem [shape: f32[2,1024], index: 0, kind: input, shape index: {}]
  %s1 = inlined_call_operand.hbm [shape: bf16[1024,256], index: 1, kind: input, shape index: {}]
  %s2 = inlined_call_operand.vmem [shape: f32[1,256], index: 2, kind: input, shape index: {}]
  %s3 = inlined_call_operand.vmem [shape: bf16[256,128], index: 3, kind: input, shape index: {}]
  %s4 = inlined_call_operand.vmem [shape: f32[1,128], index: 4, kind: input, shape index: {}]
  %s5 = inlined_call_operand.hbm [shape: bf16[128,128], index: 5, kind: input, shape index: {}]
  %s6 = inlined_call_operand.vmem [shape: f32[1,128], index: 6, kind: input, shape index: {}]
  %s7 = inlined_call_operand.hbm [shape: f32[2,128], index: 7, kind: output, shape index: {}]
  %s8 = sld [smem:[#allocation0]]
  $region46: #{conv_ccf_forward.1} parent=0
    _
  %s10 = ssub.s32 1, %s8
  %s11 = scalar_select 0, %s10, %s8
  $region1: #{conv_ccf_forward.1} parent=0
    #allocation2 [shape = 'u8[524288]{0}', space=vmem, size = 0x80000, scoped, tag = 'input window, operand 1, single buffered']
    #allocation3 [shape = 's32[1]{0}', space=sflag, size = 0x4, scoped, tag = 'scoped memory for conv_ccf_forward.1']
    #allocation4 [shape = 's32[1]{0}', space=sflag, size = 0x4, scoped, tag = 'scoped memory for conv_ccf_forward.1']
    #allocation5 [shape = 'u8[32768]{0}', space=vmem, size = 0x8000, scoped, tag = 'input window, operand 5, single buffered']
    #allocation6 [shape = 's32[1]{0}', space=sflag, size = 0x4, scoped, tag = 'scoped memory for conv_ccf_forward.1']
    #allocation7 [shape = 'u8[1024]{0}', space=vmem, size = 0x400, scoped, tag = 'output window, operand 0, single buffered']
    %12 = vsyncpa [#allocation3], 0
    %13 = vsyncpa [#allocation6], 0
    %14 = vsyncpa [#allocation4], 0
    // Predicated region
    $region2: #{conv_ccf_forward.1} parent=1 // pred_check
      _
    $region3: #{conv_ccf_forward.1} parent=1 // pred_check_branch
      %16 = sbr.rel (0) target = $region5
    $region4: #{conv_ccf_forward.1} parent=1 // pred_region
      _
    $region5: #{conv_ccf_forward.1} parent=1 // pred_fallthru
      _
    // Predicated region
    $region6: #{conv_ccf_forward.1} parent=1 // pred_check
      _
    $region7: #{conv_ccf_forward.1} parent=1 // pred_check_branch
      %18 = sbr.rel (0) target = $region9
    $region8: #{conv_ccf_forward.1} parent=1 // pred_region
      %s20 = ssub.s32 16384, 16384
      %21 = vsyncadd [#allocation3], %s20
      %s22 = sshll.u32 [#allocation2], 4
      %s23 = int_to_ptr.vmem [resolvable:$true] %s22
      %28 = dma.hbm_to_vmem [thread:$0]  %s1, 16384, %s23, [#allocation3], 128, 128, 8
    $region9: #{conv_ccf_forward.1} parent=1 // pred_fallthru
      _
    // Predicated region
    $region10: #{conv_ccf_forward.1} parent=1 // pred_check
      _
    $region11: #{conv_ccf_forward.1} parent=1 // pred_check_branch
      %30 = sbr.rel (0) target = $region13
    $region12: #{conv_ccf_forward.1} parent=1 // pred_region
      _
    $region13: #{conv_ccf_forward.1} parent=1 // pred_fallthru
      _
    // Predicated region
    $region14: #{conv_ccf_forward.1} parent=1 // pred_check
      _
    $region15: #{conv_ccf_forward.1} parent=1 // pred_check_branch
      %32 = sbr.rel (0) target = $region17
    $region16: #{conv_ccf_forward.1} parent=1 // pred_region
      _
    $region17: #{conv_ccf_forward.1} parent=1 // pred_fallthru
      _
    // Predicated region
    $region18: #{conv_ccf_forward.1} parent=1 // pred_check
      _
    $region19: #{conv_ccf_forward.1} parent=1 // pred_check_branch
      %34 = sbr.rel (0) target = $region21
    $region20: #{conv_ccf_forward.1} parent=1 // pred_region
      _
    $region21: #{conv_ccf_forward.1} parent=1 // pred_fallthru
      _
    // Predicated region
    $region22: #{conv_ccf_forward.1} parent=1 // pred_check
      _
    $region23: #{conv_ccf_forward.1} parent=1 // pred_check_branch
      %36 = sbr.rel (0) target = $region25
    $region24: #{conv_ccf_forward.1} parent=1 // pred_region
      %s38 = ssub.s32 1024, 1024
      %39 = vsyncadd [#allocation6], %s38
      %s40 = sshll.u32 [#allocation5], 4
      %s41 = int_to_ptr.vmem [resolvable:$true] %s40
      %46 = dma.hbm_to_vmem [thread:$0]  %s5, 1024, %s41, [#allocation6], 64, 64, 4
    $region25: #{conv_ccf_forward.1} parent=1 // pred_fallthru
      _
    // Predicated region
    $region26: #{conv_ccf_forward.1} parent=1 // pred_check
      _
    $region27: #{conv_ccf_forward.1} parent=1 // pred_check_branch
      %48 = sbr.rel (0) target = $region29
    $region28: #{conv_ccf_forward.1} parent=1 // pred_region
      _
    $region29: #{conv_ccf_forward.1} parent=1 // pred_fallthru
      _
    // Predicated region
    $region30: #{conv_ccf_forward.1} parent=1 // pred_check
      _
    $region31: #{conv_ccf_forward.1} parent=1 // pred_check_branch
      %50 = sbr.rel (0) target = $region33
    $region32: #{conv_ccf_forward.1} parent=1 // pred_region
      %51 = dma.done [#allocation3], 16384
    $region33: #{conv_ccf_forward.1} parent=1 // pred_fallthru
      _
    // Predicated region
    $region34: #{conv_ccf_forward.1} parent=1 // pred_check
      _
    $region35: #{conv_ccf_forward.1} parent=1 // pred_check_branch
      %53 = sbr.rel (0) target = $region37
    $region36: #{conv_ccf_forward.1} parent=1 // pred_region
      %54 = dma.done [#allocation6], 1024
    $region37: #{conv_ccf_forward.1} parent=1 // pred_fallthru
      _
    %v56 = vld [vmem:[%s0] sm:$0xff]
    %v57 = vld [vmem:[%s0 + $0x8] sm:$0xff]
    %v60 = vcombine.high %v56, %v56
    %v62 = vunpack.c.l.s4 1983009808
    %v63 = vunpack.c.0.s8 %v62
    %v64 = vlaneseq
    %v65 = vshrl.u32 %v64, 7
    %v66 = vsub.s32 %v63, %v65
    %v67 = vrot.slane %v56, %v66
    %v69 = vunpack.c.l.s4 1983009808
    %v70 = vunpack.c.0.s8 %v69
    %v71 = vlaneseq
    %v72 = vshrl.u32 %v71, 7
    %v73 = vsub.s32 %v70, %v72
    %v74 = vrot.slane %v60, %v73
    %v75 = vcombine.high %v67, %v67
    %v76 = vcombine.high %v74, %v74
    %v77 = vcombine.high %v57, %v57
    %v79 = vunpack.c.l.s4 1983009808
    %v80 = vunpack.c.0.s8 %v79
    %v81 = vlaneseq
    %v82 = vshrl.u32 %v81, 7
    %v83 = vsub.s32 %v80, %v82
    %v84 = vrot.slane %v57, %v83
    %v86 = vunpack.c.l.s4 1983009808
    %v87 = vunpack.c.0.s8 %v86
    %v88 = vlaneseq
    %v89 = vshrl.u32 %v88, 7
    %v90 = vsub.s32 %v87, %v89
    %v91 = vrot.slane %v77, %v90
    %v92 = vcombine.high %v84, %v84
    %v93 = vcombine.high %v91, %v91
    %v102 = vpack.c.bf16 %v67, %v67
    %v103 = vpack.c.bf16 %v75, %v75
    %v104 = vpack.c.bf16 %v74, %v74
    %v105 = vpack.c.bf16 %v76, %v76
    %v106 = vpack.c.bf16 %v84, %v84
    %v107 = vpack.c.bf16 %v92, %v92
    %v108 = vpack.c.bf16 %v91, %v91
    %v109 = vpack.c.bf16 %v93, %v93
    %v110 = vld [vmem:[#allocation2] sm:$0xff]
    %v111 = vld [vmem:[#allocation2 + $0x8] sm:$0xff]
    %v112 = vld [vmem:[#allocation2 + $0x10] sm:$0xff]
    %v113 = vld [vmem:[#allocation2 + $0x18] sm:$0xff]
    %v114 = vld [vmem:[#allocation2 + $0x20] sm:$0xff]
    %v115 = vld [vmem:[#allocation2 + $0x28] sm:$0xff]
    %v116 = vld [vmem:[#allocation2 + $0x30] sm:$0xff]
    %v117 = vld [vmem:[#allocation2 + $0x38] sm:$0xff]
    %v118 = vld [vmem:[#allocation2 + $0x40] sm:$0xff]
    %v119 = vld [vmem:[#allocation2 + $0x48] sm:$0xff]
    %v120 = vld [vmem:[#allocation2 + $0x50] sm:$0xff]
    %v121 = vld [vmem:[#allocation2 + $0x58] sm:$0xff]
    %v122 = vld [vmem:[#allocation2 + $0x60] sm:$0xff]
    %v123 = vld [vmem:[#allocation2 + $0x68] sm:$0xff]
    %v124 = vld [vmem:[#allocation2 + $0x70] sm:$0xff]
    %v125 = vld [vmem:[#allocation2 + $0x78] sm:$0xff]
    %v126 = vld [vmem:[#allocation2 + $0x80] sm:$0xff]
    %v127 = vld [vmem:[#allocation2 + $0x88] sm:$0xff]
    %v128 = vld [vmem:[#allocation2 + $0x90] sm:$0xff]
    %v129 = vld [vmem:[#allocation2 + $0x98] sm:$0xff]
    %v130 = vld [vmem:[#allocation2 + $0xa0] sm:$0xff]
    %v131 = vld [vmem:[#allocation2 + $0xa8] sm:$0xff]
    %v132 = vld [vmem:[#allocation2 + $0xb0] sm:$0xff]
    %v133 = vld [vmem:[#allocation2 + $0xb8] sm:$0xff]
    %v134 = vld [vmem:[#allocation2 + $0xc0] sm:$0xff]
    %v135 = vld [vmem:[#allocation2 + $0xc8] sm:$0xff]
    %v136 = vld [vmem:[#allocation2 + $0xd0] sm:$0xff]
    %v137 = vld [vmem:[#allocation2 + $0xd8] sm:$0xff]
    %v138 = vld [vmem:[#allocation2 + $0xe0] sm:$0xff]
    %v139 = vld [vmem:[#allocation2 + $0xe8] sm:$0xff]
    %v140 = vld [vmem:[#allocation2 + $0xf0] sm:$0xff]
    %v141 = vld [vmem:[#allocation2 + $0xf8] sm:$0xff]
    %v142 = vld [vmem:[#allocation2 + $0x100] sm:$0xff]
    %v143 = vld [vmem:[#allocation2 + $0x108] sm:$0xff]
    %v144 = vld [vmem:[#allocation2 + $0x110] sm:$0xff]
    %v145 = vld [vmem:[#allocation2 + $0x118] sm:$0xff]
    %v146 = vld [vmem:[#allocation2 + $0x120] sm:$0xff]
    %v147 = vld [vmem:[#allocation2 + $0x128] sm:$0xff]
    %v148 = vld [vmem:[#allocation2 + $0x130] sm:$0xff]
    %v149 = vld [vmem:[#allocation2 + $0x138] sm:$0xff]
    %v150 = vld [vmem:[#allocation2 + $0x140] sm:$0xff]
    %v151 = vld [vmem:[#allocation2 + $0x148] sm:$0xff]
    %v152 = vld [vmem:[#allocation2 + $0x150] sm:$0xff]
    %v153 = vld [vmem:[#allocation2 + $0x158] sm:$0xff]
    %v154 = vld [vmem:[#allocation2 + $0x160] sm:$0xff]
    %v155 = vld [vmem:[#allocation2 + $0x168] sm:$0xff]
    %v156 = vld [vmem:[#allocation2 + $0x170] sm:$0xff]
    %v157 = vld [vmem:[#allocation2 + $0x178] sm:$0xff]
    %v158 = vld [vmem:[#allocation2 + $0x180] sm:$0xff]
    %v159 = vld [vmem:[#allocation2 + $0x188] sm:$0xff]
    %v160 = vld [vmem:[#allocation2 + $0x190] sm:$0xff]
    %v161 = vld [vmem:[#allocation2 + $0x198] sm:$0xff]
    %v162 = vld [vmem:[#allocation2 + $0x1a0] sm:$0xff]
    %v163 = vld [vmem:[#allocation2 + $0x1a8] sm:$0xff]
    %v164 = vld [vmem:[#allocation2 + $0x1b0] sm:$0xff]
    %v165 = vld [vmem:[#allocation2 + $0x1b8] sm:$0xff]
    %v166 = vld [vmem:[#allocation2 + $0x1c0] sm:$0xff]
    %v167 = vld [vmem:[#allocation2 + $0x1c8] sm:$0xff]
    %v168 = vld [vmem:[#allocation2 + $0x1d0] sm:$0xff]
    %v169 = vld [vmem:[#allocation2 + $0x1d8] sm:$0xff]
    %v170 = vld [vmem:[#allocation2 + $0x1e0] sm:$0xff]
    %v171 = vld [vmem:[#allocation2 + $0x1e8] sm:$0xff]
    %v172 = vld [vmem:[#allocation2 + $0x1f0] sm:$0xff]
    %v173 = vld [vmem:[#allocation2 + $0x1f8] sm:$0xff]
    %v174 = vld [vmem:[#allocation2 + $0x200] sm:$0xff]
    %v175 = vld [vmem:[#allocation2 + $0x208] sm:$0xff]
    %v176 = vld [vmem:[#allocation2 + $0x210] sm:$0xff]
    %v177 = vld [vmem:[#allocation2 + $0x218] sm:$0xff]
    %v178 = vld [vmem:[#allocation2 + $0x220] sm:$0xff]
    %v179 = vld [vmem:[#allocation2 + $0x228] sm:$0xff]
    %v180 = vld [vmem:[#allocation2 + $0x230] sm:$0xff]
    %v181 = vld [vmem:[#allocation2 + $0x238] sm:$0xff]
    %v182 = vld [vmem:[#allocation2 + $0x240] sm:$0xff]
    %v183 = vld [vmem:[#allocation2 + $0x248] sm:$0xff]
    %v184 = vld [vmem:[#allocation2 + $0x250] sm:$0xff]
    %v185 = vld [vmem:[#allocation2 + $0x258] sm:$0xff]
    %v186 = vld [vmem:[#allocation2 + $0x260] sm:$0xff]
    %v187 = vld [vmem:[#allocation2 + $0x268] sm:$0xff]
    %v188 = vld [vmem:[#allocation2 + $0x270] sm:$0xff]
    %v189 = vld [vmem:[#allocation2 + $0x278] sm:$0xff]
    %v190 = vld [vmem:[#allocation2 + $0x280] sm:$0xff]
    %v191 = vld [vmem:[#allocation2 + $0x288] sm:$0xff]
    %v192 = vld [vmem:[#allocation2 + $0x290] sm:$0xff]
    %v193 = vld [vmem:[#allocation2 + $0x298] sm:$0xff]
    %v194 = vld [vmem:[#allocation2 + $0x2a0] sm:$0xff]
    %v195 = vld [vmem:[#allocation2 + $0x2a8] sm:$0xff]
    %v196 = vld [vmem:[#allocation2 + $0x2b0] sm:$0xff]
    %v197 = vld [vmem:[#allocation2 + $0x2b8] sm:$0xff]
    %v198 = vld [vmem:[#allocation2 + $0x2c0] sm:$0xff]
    %v199 = vld [vmem:[#allocation2 + $0x2c8] sm:$0xff]
    %v200 = vld [vmem:[#allocation2 + $0x2d0] sm:$0xff]
    %v201 = vld [vmem:[#allocation2 + $0x2d8] sm:$0xff]
    %v202 = vld [vmem:[#allocation2 + $0x2e0] sm:$0xff]
    %v203 = vld [vmem:[#allocation2 + $0x2e8] sm:$0xff]
    %v204 = vld [vmem:[#allocation2 + $0x2f0] sm:$0xff]
    %v205 = vld [vmem:[#allocation2 + $0x2f8] sm:$0xff]
    %v206 = vld [vmem:[#allocation2 + $0x300] sm:$0xff]
    %v207 = vld [vmem:[#allocation2 + $0x308] sm:$0xff]
    %v208 = vld [vmem:[#allocation2 + $0x310] sm:$0xff]
    %v209 = vld [vmem:[#allocation2 + $0x318] sm:$0xff]
    %v210 = vld [vmem:[#allocation2 + $0x320] sm:$0xff]
    %v211 = vld [vmem:[#allocation2 + $0x328] sm:$0xff]
    %v212 = vld [vmem:[#allocation2 + $0x330] sm:$0xff]
    %v213 = vld [vmem:[#allocation2 + $0x338] sm:$0xff]
    %v214 = vld [vmem:[#allocation2 + $0x340] sm:$0xff]
    %v215 = vld [vmem:[#allocation2 + $0x348] sm:$0xff]
    %v216 = vld [vmem:[#allocation2 + $0x350] sm:$0xff]
    %v217 = vld [vmem:[#allocation2 + $0x358] sm:$0xff]
    %v218 = vld [vmem:[#allocation2 + $0x360] sm:$0xff]
    %v219 = vld [vmem:[#allocation2 + $0x368] sm:$0xff]
    %v220 = vld [vmem:[#allocation2 + $0x370] sm:$0xff]
    %v221 = vld [vmem:[#allocation2 + $0x378] sm:$0xff]
    %v222 = vld [vmem:[#allocation2 + $0x380] sm:$0xff]
    %v223 = vld [vmem:[#allocation2 + $0x388] sm:$0xff]
    %v224 = vld [vmem:[#allocation2 + $0x390] sm:$0xff]
    %v225 = vld [vmem:[#allocation2 + $0x398] sm:$0xff]
    %v226 = vld [vmem:[#allocation2 + $0x3a0] sm:$0xff]
    %v227 = vld [vmem:[#allocation2 + $0x3a8] sm:$0xff]
    %v228 = vld [vmem:[#allocation2 + $0x3b0] sm:$0xff]
    %v229 = vld [vmem:[#allocation2 + $0x3b8] sm:$0xff]
    %v230 = vld [vmem:[#allocation2 + $0x3c0] sm:$0xff]
    %v231 = vld [vmem:[#allocation2 + $0x3c8] sm:$0xff]
    %v232 = vld [vmem:[#allocation2 + $0x3d0] sm:$0xff]
    %v233 = vld [vmem:[#allocation2 + $0x3d8] sm:$0xff]
    %v234 = vld [vmem:[#allocation2 + $0x3e0] sm:$0xff]
    %v235 = vld [vmem:[#allocation2 + $0x3e8] sm:$0xff]
    %v236 = vld [vmem:[#allocation2 + $0x3f0] sm:$0xff]
    %v237 = vld [vmem:[#allocation2 + $0x3f8] sm:$0xff]
    %v238 = vld [vmem:[%s2] sm:$0x3]
    %v240 = vlaneseq
    %v241 = vshrl.u32 %v240, 7
    %v242 = vsub.s32 0, %v241
    %v243 = vrot.slane %v238, %v242
    %v244 = vlaneseq
    %v245 = vshrl.u32 %v244, 7
    %v246 = vsub.s32 1, %v245
    %v247 = vrot.slane %v238, %v246
    %v378 = vunpack.c.l.b16 %v110
    %v379 = vunpack.c.h.b16 %v110
    %v380 = vunpack.c.l.b16 %v111
    %v381 = vunpack.c.h.b16 %v111
    %v382 = vunpack.c.l.b16 %v112
    %v383 = vunpack.c.h.b16 %v112
    %v384 = vunpack.c.l.b16 %v113
    %v385 = vunpack.c.h.b16 %v113
    %v386 = vunpack.c.l.b16 %v114
    %v387 = vunpack.c.h.b16 %v114
    %v388 = vunpack.c.l.b16 %v115
    %v389 = vunpack.c.h.b16 %v115
    %v390 = vunpack.c.l.b16 %v116
    %v391 = vunpack.c.h.b16 %v116
    %v392 = vunpack.c.l.b16 %v117
    %v393 = vunpack.c.h.b16 %v117
    %v394 = vunpack.c.l.b16 %v118
    %v395 = vunpack.c.h.b16 %v118
    %v396 = vunpack.c.l.b16 %v119
    %v397 = vunpack.c.h.b16 %v119
    %v398 = vunpack.c.l.b16 %v120
    %v399 = vunpack.c.h.b16 %v120
    %v400 = vunpack.c.l.b16 %v121
    %v401 = vunpack.c.h.b16 %v121
    %v402 = vunpack.c.l.b16 %v122
    %v403 = vunpack.c.h.b16 %v122
    %v404 = vunpack.c.l.b16 %v123
    %v405 = vunpack.c.h.b16 %v123
    %v406 = vunpack.c.l.b16 %v124
    %v407 = vunpack.c.h.b16 %v124
    %v408 = vunpack.c.l.b16 %v125
    %v409 = vunpack.c.h.b16 %v125
    %v410 = vunpack.c.l.b16 %v126
    %v411 = vunpack.c.h.b16 %v126
    %v412 = vunpack.c.l.b16 %v127
    %v413 = vunpack.c.h.b16 %v127
    %v414 = vunpack.c.l.b16 %v128
    %v415 = vunpack.c.h.b16 %v128
    %v416 = vunpack.c.l.b16 %v129
    %v417 = vunpack.c.h.b16 %v129
    %v418 = vunpack.c.l.b16 %v130
    %v419 = vunpack.c.h.b16 %v130
    %v420 = vunpack.c.l.b16 %v131
    %v421 = vunpack.c.h.b16 %v131
    %v422 = vunpack.c.l.b16 %v132
    %v423 = vunpack.c.h.b16 %v132
    %v424 = vunpack.c.l.b16 %v133
    %v425 = vunpack.c.h.b16 %v133
    %v426 = vunpack.c.l.b16 %v134
    %v427 = vunpack.c.h.b16 %v134
    %v428 = vunpack.c.l.b16 %v135
    %v429 = vunpack.c.h.b16 %v135
    %v430 = vunpack.c.l.b16 %v136
    %v431 = vunpack.c.h.b16 %v136
    %v432 = vunpack.c.l.b16 %v137
    %v433 = vunpack.c.h.b16 %v137
    %v434 = vunpack.c.l.b16 %v138
    %v435 = vunpack.c.h.b16 %v138
    %v436 = vunpack.c.l.b16 %v139
    %v437 = vunpack.c.h.b16 %v139
    %v438 = vunpack.c.l.b16 %v140
    %v439 = vunpack.c.h.b16 %v140
    %v440 = vunpack.c.l.b16 %v141
    %v441 = vunpack.c.h.b16 %v141
    %v442 = vunpack.c.l.b16 %v142
    %v443 = vunpack.c.h.b16 %v142
    %v444 = vunpack.c.l.b16 %v143
    %v445 = vunpack.c.h.b16 %v143
    %v446 = vunpack.c.l.b16 %v144
    %v447 = vunpack.c.h.b16 %v144
    %v448 = vunpack.c.l.b16 %v145
    %v449 = vunpack.c.h.b16 %v145
    %v450 = vunpack.c.l.b16 %v146
    %v451 = vunpack.c.h.b16 %v146
    %v452 = vunpack.c.l.b16 %v147
    %v453 = vunpack.c.h.b16 %v147
    %v454 = vunpack.c.l.b16 %v148
    %v455 = vunpack.c.h.b16 %v148
    %v456 = vunpack.c.l.b16 %v149
    %v457 = vunpack.c.h.b16 %v149
    %v458 = vunpack.c.l.b16 %v150
    %v459 = vunpack.c.h.b16 %v150
    %v460 = vunpack.c.l.b16 %v151
    %v461 = vunpack.c.h.b16 %v151
    %v462 = vunpack.c.l.b16 %v152
    %v463 = vunpack.c.h.b16 %v152
    %v464 = vunpack.c.l.b16 %v153
    %v465 = vunpack.c.h.b16 %v153
    %v466 = vunpack.c.l.b16 %v154
    %v467 = vunpack.c.h.b16 %v154
    %v468 = vunpack.c.l.b16 %v155
    %v469 = vunpack.c.h.b16 %v155
    %v470 = vunpack.c.l.b16 %v156
    %v471 = vunpack.c.h.b16 %v156
    %v472 = vunpack.c.l.b16 %v157
    %v473 = vunpack.c.h.b16 %v157
    %v474 = vunpack.c.l.b16 %v158
    %v475 = vunpack.c.h.b16 %v158
    %v476 = vunpack.c.l.b16 %v159
    %v477 = vunpack.c.h.b16 %v159
    %v478 = vunpack.c.l.b16 %v160
    %v479 = vunpack.c.h.b16 %v160
    %v480 = vunpack.c.l.b16 %v161
    %v481 = vunpack.c.h.b16 %v161
    %v482 = vunpack.c.l.b16 %v162
    %v483 = vunpack.c.h.b16 %v162
    %v484 = vunpack.c.l.b16 %v163
    %v485 = vunpack.c.h.b16 %v163
    %v486 = vunpack.c.l.b16 %v164
    %v487 = vunpack.c.h.b16 %v164
    %v488 = vunpack.c.l.b16 %v165
    %v489 = vunpack.c.h.b16 %v165
    %v490 = vunpack.c.l.b16 %v166
    %v491 = vunpack.c.h.b16 %v166
    %v492 = vunpack.c.l.b16 %v167
    %v493 = vunpack.c.h.b16 %v167
    %v494 = vunpack.c.l.b16 %v168
    %v495 = vunpack.c.h.b16 %v168
    %v496 = vunpack.c.l.b16 %v169
    %v497 = vunpack.c.h.b16 %v169
    %v498 = vunpack.c.l.b16 %v170
    %v499 = vunpack.c.h.b16 %v170
    %v500 = vunpack.c.l.b16 %v171
    %v501 = vunpack.c.h.b16 %v171
    %v502 = vunpack.c.l.b16 %v172
    %v503 = vunpack.c.h.b16 %v172
    %v504 = vunpack.c.l.b16 %v173
    %v505 = vunpack.c.h.b16 %v173
    %v506 = vunpack.c.l.b16 %v174
    %v507 = vunpack.c.h.b16 %v174
    %v508 = vunpack.c.l.b16 %v175
    %v509 = vunpack.c.h.b16 %v175
    %v510 = vunpack.c.l.b16 %v176
    %v511 = vunpack.c.h.b16 %v176
    %v512 = vunpack.c.l.b16 %v177
    %v513 = vunpack.c.h.b16 %v177
    %v514 = vunpack.c.l.b16 %v178
    %v515 = vunpack.c.h.b16 %v178
    %v516 = vunpack.c.l.b16 %v179
    %v517 = vunpack.c.h.b16 %v179
    %v518 = vunpack.c.l.b16 %v180
    %v519 = vunpack.c.h.b16 %v180
    %v520 = vunpack.c.l.b16 %v181
    %v521 = vunpack.c.h.b16 %v181
    %v522 = vunpack.c.l.b16 %v182
    %v523 = vunpack.c.h.b16 %v182
    %v524 = vunpack.c.l.b16 %v183
    %v525 = vunpack.c.h.b16 %v183
    %v526 = vunpack.c.l.b16 %v184
    %v527 = vunpack.c.h.b16 %v184
    %v528 = vunpack.c.l.b16 %v185
    %v529 = vunpack.c.h.b16 %v185
    %v530 = vunpack.c.l.b16 %v186
    %v531 = vunpack.c.h.b16 %v186
    %v532 = vunpack.c.l.b16 %v187
    %v533 = vunpack.c.h.b16 %v187
    %v534 = vunpack.c.l.b16 %v188
    %v535 = vunpack.c.h.b16 %v188
    %v536 = vunpack.c.l.b16 %v189
    %v537 = vunpack.c.h.b16 %v189
    %v538 = vunpack.c.l.b16 %v190
    %v539 = vunpack.c.h.b16 %v190
    %v540 = vunpack.c.l.b16 %v191
    %v541 = vunpack.c.h.b16 %v191
    %v542 = vunpack.c.l.b16 %v192
    %v543 = vunpack.c.h.b16 %v192
    %v544 = vunpack.c.l.b16 %v193
    %v545 = vunpack.c.h.b16 %v193
    %v546 = vunpack.c.l.b16 %v194
    %v547 = vunpack.c.h.b16 %v194
    %v548 = vunpack.c.l.b16 %v195
    %v549 = vunpack.c.h.b16 %v195
    %v550 = vunpack.c.l.b16 %v196
    %v551 = vunpack.c.h.b16 %v196
    %v552 = vunpack.c.l.b16 %v197
    %v553 = vunpack.c.h.b16 %v197
    %v554 = vunpack.c.l.b16 %v198
    %v555 = vunpack.c.h.b16 %v198
    %v556 = vunpack.c.l.b16 %v199
    %v557 = vunpack.c.h.b16 %v199
    %v558 = vunpack.c.l.b16 %v200
    %v559 = vunpack.c.h.b16 %v200
    %v560 = vunpack.c.l.b16 %v201
    %v561 = vunpack.c.h.b16 %v201
    %v562 = vunpack.c.l.b16 %v202
    %v563 = vunpack.c.h.b16 %v202
    %v564 = vunpack.c.l.b16 %v203
    %v565 = vunpack.c.h.b16 %v203
    %v566 = vunpack.c.l.b16 %v204
    %v567 = vunpack.c.h.b16 %v204
    %v568 = vunpack.c.l.b16 %v205
    %v569 = vunpack.c.h.b16 %v205
    %v570 = vunpack.c.l.b16 %v206
    %v571 = vunpack.c.h.b16 %v206
    %v572 = vunpack.c.l.b16 %v207
    %v573 = vunpack.c.h.b16 %v207
    %v574 = vunpack.c.l.b16 %v208
    %v575 = vunpack.c.h.b16 %v208
    %v576 = vunpack.c.l.b16 %v209
    %v577 = vunpack.c.h.b16 %v209
    %v578 = vunpack.c.l.b16 %v210
    %v579 = vunpack.c.h.b16 %v210
    %v580 = vunpack.c.l.b16 %v211
    %v581 = vunpack.c.h.b16 %v211
    %v582 = vunpack.c.l.b16 %v212
    %v583 = vunpack.c.h.b16 %v212
    %v584 = vunpack.c.l.b16 %v213
    %v585 = vunpack.c.h.b16 %v213
    %v586 = vunpack.c.l.b16 %v214
    %v587 = vunpack.c.h.b16 %v214
    %v588 = vunpack.c.l.b16 %v215
    %v589 = vunpack.c.h.b16 %v215
    %v590 = vunpack.c.l.b16 %v216
    %v591 = vunpack.c.h.b16 %v216
    %v592 = vunpack.c.l.b16 %v217
    %v593 = vunpack.c.h.b16 %v217
    %v594 = vunpack.c.l.b16 %v218
    %v595 = vunpack.c.h.b16 %v218
    %v596 = vunpack.c.l.b16 %v219
    %v597 = vunpack.c.h.b16 %v219
    %v598 = vunpack.c.l.b16 %v220
    %v599 = vunpack.c.h.b16 %v220
    %v600 = vunpack.c.l.b16 %v221
    %v601 = vunpack.c.h.b16 %v221
    %v602 = vunpack.c.l.b16 %v222
    %v603 = vunpack.c.h.b16 %v222
    %v604 = vunpack.c.l.b16 %v223
    %v605 = vunpack.c.h.b16 %v223
    %v606 = vunpack.c.l.b16 %v224
    %v607 = vunpack.c.h.b16 %v224
    %v608 = vunpack.c.l.b16 %v225
    %v609 = vunpack.c.h.b16 %v225
    %v610 = vunpack.c.l.b16 %v226
    %v611 = vunpack.c.h.b16 %v226
    %v612 = vunpack.c.l.b16 %v227
    %v613 = vunpack.c.h.b16 %v227
    %v614 = vunpack.c.l.b16 %v228
    %v615 = vunpack.c.h.b16 %v228
    %v616 = vunpack.c.l.b16 %v229
    %v617 = vunpack.c.h.b16 %v229
    %v618 = vunpack.c.l.b16 %v230
    %v619 = vunpack.c.h.b16 %v230
    %v620 = vunpack.c.l.b16 %v231
    %v621 = vunpack.c.h.b16 %v231
    %v622 = vunpack.c.l.b16 %v232
    %v623 = vunpack.c.h.b16 %v232
    %v624 = vunpack.c.l.b16 %v233
    %v625 = vunpack.c.h.b16 %v233
    %v626 = vunpack.c.l.b16 %v234
    %v627 = vunpack.c.h.b16 %v234
    %v628 = vunpack.c.l.b16 %v235
    %v629 = vunpack.c.h.b16 %v235
    %v630 = vunpack.c.l.b16 %v236
    %v631 = vunpack.c.h.b16 %v236
    %v632 = vunpack.c.l.b16 %v237
    %v633 = vunpack.c.h.b16 %v237
    %v634 = vpack.c.b16 %v380, %v378
    %v635 = vpack.c.b16 %v381, %v379
    %v636 = vpack.c.b16 %v384, %v382
    %v637 = vpack.c.b16 %v385, %v383
    %v638 = vpack.c.b16 %v388, %v386
    %v639 = vpack.c.b16 %v389, %v387
    %v640 = vpack.c.b16 %v392, %v390
    %v641 = vpack.c.b16 %v393, %v391
    %v642 = vpack.c.b16 %v396, %v394
    %v643 = vpack.c.b16 %v397, %v395
    %v644 = vpack.c.b16 %v400, %v398
    %v645 = vpack.c.b16 %v401, %v399
    %v646 = vpack.c.b16 %v404, %v402
    %v647 = vpack.c.b16 %v405, %v403
    %v648 = vpack.c.b16 %v408, %v406
    %v649 = vpack.c.b16 %v409, %v407
    %v650 = vpack.c.b16 %v412, %v410
    %v651 = vpack.c.b16 %v413, %v411
    %v652 = vpack.c.b16 %v416, %v414
    %v653 = vpack.c.b16 %v417, %v415
    %v654 = vpack.c.b16 %v420, %v418
    %v655 = vpack.c.b16 %v421, %v419
    %v656 = vpack.c.b16 %v424, %v422
    %v657 = vpack.c.b16 %v425, %v423
    %v658 = vpack.c.b16 %v428, %v426
    %v659 = vpack.c.b16 %v429, %v427
    %v660 = vpack.c.b16 %v432, %v430
    %v661 = vpack.c.b16 %v433, %v431
    %v662 = vpack.c.b16 %v436, %v434
    %v663 = vpack.c.b16 %v437, %v435
    %v664 = vpack.c.b16 %v440, %v438
    %v665 = vpack.c.b16 %v441, %v439
    %v666 = vpack.c.b16 %v444, %v442
    %v667 = vpack.c.b16 %v445, %v443
    %v668 = vpack.c.b16 %v448, %v446
    %v669 = vpack.c.b16 %v449, %v447
    %v670 = vpack.c.b16 %v452, %v450
    %v671 = vpack.c.b16 %v453, %v451
    %v672 = vpack.c.b16 %v456, %v454
    %v673 = vpack.c.b16 %v457, %v455
    %v674 = vpack.c.b16 %v460, %v458
    %v675 = vpack.c.b16 %v461, %v459
    %v676 = vpack.c.b16 %v464, %v462
    %v677 = vpack.c.b16 %v465, %v463
    %v678 = vpack.c.b16 %v468, %v466
    %v679 = vpack.c.b16 %v469, %v467
    %v680 = vpack.c.b16 %v472, %v470
    %v681 = vpack.c.b16 %v473, %v471
    %v682 = vpack.c.b16 %v476, %v474
    %v683 = vpack.c.b16 %v477, %v475
    %v684 = vpack.c.b16 %v480, %v478
    %v685 = vpack.c.b16 %v481, %v479
    %v686 = vpack.c.b16 %v484, %v482
    %v687 = vpack.c.b16 %v485, %v483
    %v688 = vpack.c.b16 %v488, %v486
    %v689 = vpack.c.b16 %v489, %v487
    %v690 = vpack.c.b16 %v492, %v490
    %v691 = vpack.c.b16 %v493, %v491
    %v692 = vpack.c.b16 %v496, %v494
    %v693 = vpack.c.b16 %v497, %v495
    %v694 = vpack.c.b16 %v500, %v498
    %v695 = vpack.c.b16 %v501, %v499
    %v696 = vpack.c.b16 %v504, %v502
    %v697 = vpack.c.b16 %v505, %v503
    %v698 = vpack.c.b16 %v508, %v506
    %v699 = vpack.c.b16 %v509, %v507
    %v700 = vpack.c.b16 %v512, %v510
    %v701 = vpack.c.b16 %v513, %v511
    %v702 = vpack.c.b16 %v516, %v514
    %v703 = vpack.c.b16 %v517, %v515
    %v704 = vpack.c.b16 %v520, %v518
    %v705 = vpack.c.b16 %v521, %v519
    %v706 = vpack.c.b16 %v524, %v522
    %v707 = vpack.c.b16 %v525, %v523
    %v708 = vpack.c.b16 %v528, %v526
    %v709 = vpack.c.b16 %v529, %v527
    %v710 = vpack.c.b16 %v532, %v530
    %v711 = vpack.c.b16 %v533, %v531
    %v712 = vpack.c.b16 %v536, %v534
    %v713 = vpack.c.b16 %v537, %v535
    %v714 = vpack.c.b16 %v540, %v538
    %v715 = vpack.c.b16 %v541, %v539
    %v716 = vpack.c.b16 %v544, %v542
    %v717 = vpack.c.b16 %v545, %v543
    %v718 = vpack.c.b16 %v548, %v546
    %v719 = vpack.c.b16 %v549, %v547
    %v720 = vpack.c.b16 %v552, %v550
    %v721 = vpack.c.b16 %v553, %v551
    %v722 = vpack.c.b16 %v556, %v554
    %v723 = vpack.c.b16 %v557, %v555
    %v724 = vpack.c.b16 %v560, %v558
    %v725 = vpack.c.b16 %v561, %v559
    %v726 = vpack.c.b16 %v564, %v562
    %v727 = vpack.c.b16 %v565, %v563
    %v728 = vpack.c.b16 %v568, %v566
    %v729 = vpack.c.b16 %v569, %v567
    %v730 = vpack.c.b16 %v572, %v570
    %v731 = vpack.c.b16 %v573, %v571
    %v732 = vpack.c.b16 %v576, %v574
    %v733 = vpack.c.b16 %v577, %v575
    %v734 = vpack.c.b16 %v580, %v578
    %v735 = vpack.c.b16 %v581, %v579
    %v736 = vpack.c.b16 %v584, %v582
    %v737 = vpack.c.b16 %v585, %v583
    %v738 = vpack.c.b16 %v588, %v586
    %v739 = vpack.c.b16 %v589, %v587
    %v740 = vpack.c.b16 %v592, %v590
    %v741 = vpack.c.b16 %v593, %v591
    %v742 = vpack.c.b16 %v596, %v594
    %v743 = vpack.c.b16 %v597, %v595
    %v744 = vpack.c.b16 %v600, %v598
    %v745 = vpack.c.b16 %v601, %v599
    %v746 = vpack.c.b16 %v604, %v602
    %v747 = vpack.c.b16 %v605, %v603
    %v748 = vpack.c.b16 %v608, %v606
    %v749 = vpack.c.b16 %v609, %v607
    %v750 = vpack.c.b16 %v612, %v610
    %v751 = vpack.c.b16 %v613, %v611
    %v752 = vpack.c.b16 %v616, %v614
    %v753 = vpack.c.b16 %v617, %v615
    %v754 = vpack.c.b16 %v620, %v618
    %v755 = vpack.c.b16 %v621, %v619
    %v756 = vpack.c.b16 %v624, %v622
    %v757 = vpack.c.b16 %v625, %v623
    %v758 = vpack.c.b16 %v628, %v626
    %v759 = vpack.c.b16 %v629, %v627
    %v760 = vpack.c.b16 %v632, %v630
    %v761 = vpack.c.b16 %v633, %v631
    %890 = vmatprep.subr.bf16.mxu0 %v649
    %891 = vmatpush1.bf16.msra.mxu0 %v648
    %892 = vmatprep.subr.bf16.mxu0 %v647
    %893 = vmatpush1.bf16.msra.mxu0 %v646
    %894 = vmatprep.subr.bf16.mxu0 %v645
    %895 = vmatpush1.bf16.msra.mxu0 %v644
    %896 = vmatprep.subr.bf16.mxu0 %v643
    %897 = vmatpush1.bf16.msra.mxu0 %v642
    %898 = vmatprep.subr.bf16.mxu0 %v641
    %899 = vmatpush1.bf16.msra.mxu0 %v640
    %900 = vmatprep.subr.bf16.mxu0 %v639
    %901 = vmatpush1.bf16.msra.mxu0 %v638
    %902 = vmatprep.subr.bf16.mxu0 %v637
    %903 = vmatpush1.bf16.msra.mxu0 %v636
    %904 = vmatprep.subr.bf16.mxu0 %v635
    %905 = vmatpush1.bf16.msra.mxu0 %v634
    %906 = vmatprep.subr.bf16.mxu0 %v665
    %907 = vmatpush2.bf16.msra.mxu0 %v664
    %908 = vmatprep.subr.bf16.mxu0 %v663
    %909 = vmatpush2.bf16.msra.mxu0 %v662
    %910 = vmatprep.subr.bf16.mxu0 %v661
    %911 = vmatpush2.bf16.msra.mxu0 %v660
    %912 = vmatprep.subr.bf16.mxu0 %v659
    %913 = vmatpush2.bf16.msra.mxu0 %v658
    %914 = vmatprep.subr.bf16.mxu0 %v657
    %915 = vmatpush2.bf16.msra.mxu0 %v656
    %916 = vmatprep.subr.bf16.mxu0 %v655
    %917 = vmatpush2.bf16.msra.mxu0 %v654
    %918 = vmatprep.subr.bf16.mxu0 %v653
    %919 = vmatpush2.bf16.msra.mxu0 %v652
    %920 = vmatprep.subr.bf16.mxu0 %v651
    %921 = vmatpush2.bf16.msra.mxu0 %v650
    %922 = vmatprep.mubr.bf16.mxu0 %v103
    %923 = vmatmul.mubr.bf16.gmra.mxu0 %v102
    %v924 = vpop.f32.mrf.mxu0
    %v925 = vadd.f32 %v243, %v924
    %v926 = vpop.f32.mrf.mxu0
    %v927 = vadd.f32 %v247, %v926
    %v928 = vpop.f32.mrf.mxu0
    %v929 = vpop.f32.mrf.mxu0
    %930 = vdwg.mxu0
    %931 = vmatprep.subr.bf16.mxu0 %v681
    %932 = vmatpush1.bf16.msra.mxu0 %v680
    %933 = vmatprep.subr.bf16.mxu0 %v679
    %934 = vmatpush1.bf16.msra.mxu0 %v678
    %935 = vmatprep.subr.bf16.mxu0 %v677
    %936 = vmatpush1.bf16.msra.mxu0 %v676
    %937 = vmatprep.subr.bf16.mxu0 %v675
    %938 = vmatpush1.bf16.msra.mxu0 %v674
    %939 = vmatprep.subr.bf16.mxu0 %v673
    %940 = vmatpush1.bf16.msra.mxu0 %v672
    %941 = vmatprep.subr.bf16.mxu0 %v671
    %942 = vmatpush1.bf16.msra.mxu0 %v670
    %943 = vmatprep.subr.bf16.mxu0 %v669
    %944 = vmatpush1.bf16.msra.mxu0 %v668
    %945 = vmatprep.subr.bf16.mxu0 %v667
    %946 = vmatpush1.bf16.msra.mxu0 %v666
    %947 = vmatprep.subr.bf16.mxu0 %v697
    %948 = vmatpush2.bf16.msra.mxu0 %v696
    %949 = vmatprep.subr.bf16.mxu0 %v695
    %950 = vmatpush2.bf16.msra.mxu0 %v694
    %951 = vmatprep.subr.bf16.mxu0 %v693
    %952 = vmatpush2.bf16.msra.mxu0 %v692
    %953 = vmatprep.subr.bf16.mxu0 %v691
    %954 = vmatpush2.bf16.msra.mxu0 %v690
    %955 = vmatprep.subr.bf16.mxu0 %v689
    %956 = vmatpush2.bf16.msra.mxu0 %v688
    %957 = vmatprep.subr.bf16.mxu0 %v687
    %958 = vmatpush2.bf16.msra.mxu0 %v686
    %959 = vmatprep.subr.bf16.mxu0 %v685
    %960 = vmatpush2.bf16.msra.mxu0 %v684
    %961 = vmatprep.subr.bf16.mxu0 %v683
    %962 = vmatpush2.bf16.msra.mxu0 %v682
    %963 = vmatprep.mubr.bf16.mxu0 %v105
    %964 = vmatmul.mubr.bf16.gmra.mxu0 %v104
    %v965 = vpop.f32.mrf.mxu0
    %v966 = vadd.f32 %v925, %v965
    %v967 = vpop.f32.mrf.mxu0
    %v968 = vadd.f32 %v927, %v967
    %v969 = vpop.f32.mrf.mxu0
    %v970 = vpop.f32.mrf.mxu0
    %971 = vdwg.mxu0
    %972 = vmatprep.subr.bf16.mxu0 %v713
    %973 = vmatpush1.bf16.msra.mxu0 %v712
    %974 = vmatprep.subr.bf16.mxu0 %v711
    %975 = vmatpush1.bf16.msra.mxu0 %v710
    %976 = vmatprep.subr.bf16.mxu0 %v709
    %977 = vmatpush1.bf16.msra.mxu0 %v708
    %978 = vmatprep.subr.bf16.mxu0 %v707
    %979 = vmatpush1.bf16.msra.mxu0 %v706
    %980 = vmatprep.subr.bf16.mxu0 %v705
    %981 = vmatpush1.bf16.msra.mxu0 %v704
    %982 = vmatprep.subr.bf16.mxu0 %v703
    %983 = vmatpush1.bf16.msra.mxu0 %v702
    %984 = vmatprep.subr.bf16.mxu0 %v701
    %985 = vmatpush1.bf16.msra.mxu0 %v700
    %986 = vmatprep.subr.bf16.mxu0 %v699
    %987 = vmatpush1.bf16.msra.mxu0 %v698
    %988 = vmatprep.subr.bf16.mxu0 %v729
    %989 = vmatpush2.bf16.msra.mxu0 %v728
    %990 = vmatprep.subr.bf16.mxu0 %v727
    %991 = vmatpush2.bf16.msra.mxu0 %v726
    %992 = vmatprep.subr.bf16.mxu0 %v725
    %993 = vmatpush2.bf16.msra.mxu0 %v724
    %994 = vmatprep.subr.bf16.mxu0 %v723
    %995 = vmatpush2.bf16.msra.mxu0 %v722
    %996 = vmatprep.subr.bf16.mxu0 %v721
    %997 = vmatpush2.bf16.msra.mxu0 %v720
    %998 = vmatprep.subr.bf16.mxu0 %v719
    %999 = vmatpush2.bf16.msra.mxu0 %v718
    %1000 = vmatprep.subr.bf16.mxu0 %v717
    %1001 = vmatpush2.bf16.msra.mxu0 %v716
    %1002 = vmatprep.subr.bf16.mxu0 %v715
    %1003 = vmatpush2.bf16.msra.mxu0 %v714
    %1004 = vmatprep.mubr.bf16.mxu0 %v107
    %1005 = vmatmul.mubr.bf16.gmra.mxu0 %v106
    %v1006 = vpop.f32.mrf.mxu0
    %v1007 = vadd.f32 %v966, %v1006
    %v1008 = vpop.f32.mrf.mxu0
    %v1009 = vadd.f32 %v968, %v1008
    %v1010 = vpop.f32.mrf.mxu0
    %v1011 = vpop.f32.mrf.mxu0
    %1012 = vdwg.mxu0
    %1013 = vmatprep.subr.bf16.mxu0 %v745
    %1014 = vmatpush1.bf16.msra.mxu0 %v744
    %1015 = vmatprep.subr.bf16.mxu0 %v743
    %1016 = vmatpush1.bf16.msra.mxu0 %v742
    %1017 = vmatprep.subr.bf16.mxu0 %v741
    %1018 = vmatpush1.bf16.msra.mxu0 %v740
    %1019 = vmatprep.subr.bf16.mxu0 %v739
    %1020 = vmatpush1.bf16.msra.mxu0 %v738
    %1021 = vmatprep.subr.bf16.mxu0 %v737
    %1022 = vmatpush1.bf16.msra.mxu0 %v736
    %1023 = vmatprep.subr.bf16.mxu0 %v735
    %1024 = vmatpush1.bf16.msra.mxu0 %v734
    %1025 = vmatprep.subr.bf16.mxu0 %v733
    %1026 = vmatpush1.bf16.msra.mxu0 %v732
    %1027 = vmatprep.subr.bf16.mxu0 %v731
    %1028 = vmatpush1.bf16.msra.mxu0 %v730
    %1029 = vmatprep.subr.bf16.mxu0 %v761
    %1030 = vmatpush2.bf16.msra.mxu0 %v760
    %1031 = vmatprep.subr.bf16.mxu0 %v759
    %1032 = vmatpush2.bf16.msra.mxu0 %v758
    %1033 = vmatprep.subr.bf16.mxu0 %v757
    %1034 = vmatpush2.bf16.msra.mxu0 %v756
    %1035 = vmatprep.subr.bf16.mxu0 %v755
    %1036 = vmatpush2.bf16.msra.mxu0 %v754
    %1037 = vmatprep.subr.bf16.mxu0 %v753
    %1038 = vmatpush2.bf16.msra.mxu0 %v752
    %1039 = vmatprep.subr.bf16.mxu0 %v751
    %1040 = vmatpush2.bf16.msra.mxu0 %v750
    %1041 = vmatprep.subr.bf16.mxu0 %v749
    %1042 = vmatpush2.bf16.msra.mxu0 %v748
    %1043 = vmatprep.subr.bf16.mxu0 %v747
    %1044 = vmatpush2.bf16.msra.mxu0 %v746
    %1045 = vmatprep.mubr.bf16.mxu0 %v109
    %1046 = vmatmul.mubr.bf16.gmra.mxu0 %v108
    %v1047 = vpop.f32.mrf.mxu0
    %v1048 = vadd.f32 %v1007, %v1047
    %v1049 = vpop.f32.mrf.mxu0
    %v1050 = vadd.f32 %v1009, %v1049
    %v1051 = vpop.f32.mrf.mxu0
    %v1052 = vpop.f32.mrf.mxu0
    %1053 = vdwg.mxu0
    %v1054 = vmax.f32 %v1048, 0.0
    %v1055 = vmax.f32 %v1050, 0.0
    %v1056 = vpack.c.bf16 %v1054, %v1054
    %v1057 = vpack.c.bf16 %v1055, %v1055
    %v1058 = vld [vmem:[%s3] sm:$0xf]
    %v1059 = vld [vmem:[%s3 + $0x4] sm:$0xf]
    %v1060 = vld [vmem:[%s3 + $0x8] sm:$0xf]
    %v1061 = vld [vmem:[%s3 + $0xc] sm:$0xf]
    %v1062 = vld [vmem:[%s3 + $0x10] sm:$0xf]
    %v1063 = vld [vmem:[%s3 + $0x14] sm:$0xf]
    %v1064 = vld [vmem:[%s3 + $0x18] sm:$0xf]
    %v1065 = vld [vmem:[%s3 + $0x1c] sm:$0xf]
    %v1066 = vld [vmem:[%s3 + $0x20] sm:$0xf]
    %v1067 = vld [vmem:[%s3 + $0x24] sm:$0xf]
    %v1068 = vld [vmem:[%s3 + $0x28] sm:$0xf]
    %v1069 = vld [vmem:[%s3 + $0x2c] sm:$0xf]
    %v1070 = vld [vmem:[%s3 + $0x30] sm:$0xf]
    %v1071 = vld [vmem:[%s3 + $0x34] sm:$0xf]
    %v1072 = vld [vmem:[%s3 + $0x38] sm:$0xf]
    %v1073 = vld [vmem:[%s3 + $0x3c] sm:$0xf]
    %v1074 = vld [vmem:[%s3 + $0x40] sm:$0xf]
    %v1075 = vld [vmem:[%s3 + $0x44] sm:$0xf]
    %v1076 = vld [vmem:[%s3 + $0x48] sm:$0xf]
    %v1077 = vld [vmem:[%s3 + $0x4c] sm:$0xf]
    %v1078 = vld [vmem:[%s3 + $0x50] sm:$0xf]
    %v1079 = vld [vmem:[%s3 + $0x54] sm:$0xf]
    %v1080 = vld [vmem:[%s3 + $0x58] sm:$0xf]
    %v1081 = vld [vmem:[%s3 + $0x5c] sm:$0xf]
    %v1082 = vld [vmem:[%s3 + $0x60] sm:$0xf]
    %v1083 = vld [vmem:[%s3 + $0x64] sm:$0xf]
    %v1084 = vld [vmem:[%s3 + $0x68] sm:$0xf]
    %v1085 = vld [vmem:[%s3 + $0x6c] sm:$0xf]
    %v1086 = vld [vmem:[%s3 + $0x70] sm:$0xf]
    %v1087 = vld [vmem:[%s3 + $0x74] sm:$0xf]
    %v1088 = vld [vmem:[%s3 + $0x78] sm:$0xf]
    %v1089 = vld [vmem:[%s3 + $0x7c] sm:$0xf]
    %v1090 = vld [vmem:[%s4] sm:$0x1]
    %v1092 = vlaneseq
    %v1093 = vshrl.u32 %v1092, 7
    %v1094 = vsub.s32 0, %v1093
    %v1095 = vrot.slane %v1090, %v1094
    %v1129 = vunpack.c.l.b16 %v1058
    %v1130 = vunpack.c.l.b16 %v1059
    %v1131 = vunpack.c.l.b16 %v1060
    %v1132 = vunpack.c.l.b16 %v1061
    %v1133 = vunpack.c.l.b16 %v1062
    %v1134 = vunpack.c.l.b16 %v1063
    %v1135 = vunpack.c.l.b16 %v1064
    %v1136 = vunpack.c.l.b16 %v1065
    %v1137 = vunpack.c.l.b16 %v1066
    %v1138 = vunpack.c.l.b16 %v1067
    %v1139 = vunpack.c.l.b16 %v1068
    %v1140 = vunpack.c.l.b16 %v1069
    %v1141 = vunpack.c.l.b16 %v1070
    %v1142 = vunpack.c.l.b16 %v1071
    %v1143 = vunpack.c.l.b16 %v1072
    %v1144 = vunpack.c.l.b16 %v1073
    %v1145 = vunpack.c.l.b16 %v1074
    %v1146 = vunpack.c.l.b16 %v1075
    %v1147 = vunpack.c.l.b16 %v1076
    %v1148 = vunpack.c.l.b16 %v1077
    %v1149 = vunpack.c.l.b16 %v1078
    %v1150 = vunpack.c.l.b16 %v1079
    %v1151 = vunpack.c.l.b16 %v1080
    %v1152 = vunpack.c.l.b16 %v1081
    %v1153 = vunpack.c.l.b16 %v1082
    %v1154 = vunpack.c.l.b16 %v1083
    %v1155 = vunpack.c.l.b16 %v1084
    %v1156 = vunpack.c.l.b16 %v1085
    %v1157 = vunpack.c.l.b16 %v1086
    %v1158 = vunpack.c.l.b16 %v1087
    %v1159 = vunpack.c.l.b16 %v1088
    %v1160 = vunpack.c.l.b16 %v1089
    %v1161 = vpack.c.b16 %v1130, %v1129
    %v1162 = vpack.c.b16 %v1132, %v1131
    %v1163 = vpack.c.b16 %v1134, %v1133
    %v1164 = vpack.c.b16 %v1136, %v1135
    %v1165 = vpack.c.b16 %v1138, %v1137
    %v1166 = vpack.c.b16 %v1140, %v1139
    %v1167 = vpack.c.b16 %v1142, %v1141
    %v1168 = vpack.c.b16 %v1144, %v1143
    %v1169 = vpack.c.b16 %v1146, %v1145
    %v1170 = vpack.c.b16 %v1148, %v1147
    %v1171 = vpack.c.b16 %v1150, %v1149
    %v1172 = vpack.c.b16 %v1152, %v1151
    %v1173 = vpack.c.b16 %v1154, %v1153
    %v1174 = vpack.c.b16 %v1156, %v1155
    %v1175 = vpack.c.b16 %v1158, %v1157
    %v1176 = vpack.c.b16 %v1160, %v1159
    %1193 = vmatprep.subr.bf16.mxu0 0
    %1194 = vmatpush1.bf16.msra.mxu0 %v1168
    %1195 = vmatprep.subr.bf16.mxu0 0
    %1196 = vmatpush1.bf16.msra.mxu0 %v1167
    %1197 = vmatprep.subr.bf16.mxu0 0
    %1198 = vmatpush1.bf16.msra.mxu0 %v1166
    %1199 = vmatprep.subr.bf16.mxu0 0
    %1200 = vmatpush1.bf16.msra.mxu0 %v1165
    %1201 = vmatprep.subr.bf16.mxu0 0
    %1202 = vmatpush1.bf16.msra.mxu0 %v1164
    %1203 = vmatprep.subr.bf16.mxu0 0
    %1204 = vmatpush1.bf16.msra.mxu0 %v1163
    %1205 = vmatprep.subr.bf16.mxu0 0
    %1206 = vmatpush1.bf16.msra.mxu0 %v1162
    %1207 = vmatprep.subr.bf16.mxu0 0
    %1208 = vmatpush1.bf16.msra.mxu0 %v1161
    %1209 = vmatprep.subr.bf16.mxu0 0
    %1210 = vmatpush2.bf16.msra.mxu0 %v1176
    %1211 = vmatprep.subr.bf16.mxu0 0
    %1212 = vmatpush2.bf16.msra.mxu0 %v1175
    %1213 = vmatprep.subr.bf16.mxu0 0
    %1214 = vmatpush2.bf16.msra.mxu0 %v1174
    %1215 = vmatprep.subr.bf16.mxu0 0
    %1216 = vmatpush2.bf16.msra.mxu0 %v1173
    %1217 = vmatprep.subr.bf16.mxu0 0
    %1218 = vmatpush2.bf16.msra.mxu0 %v1172
    %1219 = vmatprep.subr.bf16.mxu0 0
    %1220 = vmatpush2.bf16.msra.mxu0 %v1171
    %1221 = vmatprep.subr.bf16.mxu0 0
    %1222 = vmatpush2.bf16.msra.mxu0 %v1170
    %1223 = vmatprep.subr.bf16.mxu0 0
    %1224 = vmatpush2.bf16.msra.mxu0 %v1169
    %1225 = vmatprep.mubr.bf16.mxu0 %v1057
    %1226 = vmatmul.mubr.bf16.gmra.mxu0 %v1056
    %v1227 = vpop.f32.mrf.mxu0
    %v1228 = vadd.f32 %v1095, %v1227
    %v1229 = vpop.f32.mrf.mxu0
    %v1230 = vpop.f32.mrf.mxu0
    %v1231 = vpop.f32.mrf.mxu0
    %1232 = vdwg.mxu0
    %v1233 = vmax.f32 %v1228, 0.0
    %v1234 = vpack.c.bf16 %v1233, %v1233
    %v1235 = vld [vmem:[#allocation5] sm:$0xf]
    %v1236 = vld [vmem:[#allocation5 + $0x4] sm:$0xf]
    %v1237 = vld [vmem:[#allocation5 + $0x8] sm:$0xf]
    %v1238 = vld [vmem:[#allocation5 + $0xc] sm:$0xf]
    %v1239 = vld [vmem:[#allocation5 + $0x10] sm:$0xf]
    %v1240 = vld [vmem:[#allocation5 + $0x14] sm:$0xf]
    %v1241 = vld [vmem:[#allocation5 + $0x18] sm:$0xf]
    %v1242 = vld [vmem:[#allocation5 + $0x1c] sm:$0xf]
    %v1243 = vld [vmem:[#allocation5 + $0x20] sm:$0xf]
    %v1244 = vld [vmem:[#allocation5 + $0x24] sm:$0xf]
    %v1245 = vld [vmem:[#allocation5 + $0x28] sm:$0xf]
    %v1246 = vld [vmem:[#allocation5 + $0x2c] sm:$0xf]
    %v1247 = vld [vmem:[#allocation5 + $0x30] sm:$0xf]
    %v1248 = vld [vmem:[#allocation5 + $0x34] sm:$0xf]
    %v1249 = vld [vmem:[#allocation5 + $0x38] sm:$0xf]
    %v1250 = vld [vmem:[#allocation5 + $0x3c] sm:$0xf]
    %v1251 = vld [vmem:[%s6] sm:$0x1]
    %v1253 = vlaneseq
    %v1254 = vshrl.u32 %v1253, 7
    %v1255 = vsub.s32 0, %v1254
    %v1256 = vrot.slane %v1251, %v1255
    %v1274 = vunpack.c.l.b16 %v1235
    %v1275 = vunpack.c.l.b16 %v1236
    %v1276 = vunpack.c.l.b16 %v1237
    %v1277 = vunpack.c.l.b16 %v1238
    %v1278 = vunpack.c.l.b16 %v1239
    %v1279 = vunpack.c.l.b16 %v1240
    %v1280 = vunpack.c.l.b16 %v1241
    %v1281 = vunpack.c.l.b16 %v1242
    %v1282 = vunpack.c.l.b16 %v1243
    %v1283 = vunpack.c.l.b16 %v1244
    %v1284 = vunpack.c.l.b16 %v1245
    %v1285 = vunpack.c.l.b16 %v1246
    %v1286 = vunpack.c.l.b16 %v1247
    %v1287 = vunpack.c.l.b16 %v1248
    %v1288 = vunpack.c.l.b16 %v1249
    %v1289 = vunpack.c.l.b16 %v1250
    %v1290 = vpack.c.b16 %v1275, %v1274
    %v1291 = vpack.c.b16 %v1277, %v1276
    %v1292 = vpack.c.b16 %v1279, %v1278
    %v1293 = vpack.c.b16 %v1281, %v1280
    %v1294 = vpack.c.b16 %v1283, %v1282
    %v1295 = vpack.c.b16 %v1285, %v1284
    %v1296 = vpack.c.b16 %v1287, %v1286
    %v1297 = vpack.c.b16 %v1289, %v1288
    %1306 = vmatprep.subr.bf16.mxu0 0
    %1307 = vmatpush1.bf16.msra.mxu0 %v1297
    %1308 = vmatprep.subr.bf16.mxu0 0
    %1309 = vmatpush1.bf16.msra.mxu0 %v1296
    %1310 = vmatprep.subr.bf16.mxu0 0
    %1311 = vmatpush1.bf16.msra.mxu0 %v1295
    %1312 = vmatprep.subr.bf16.mxu0 0
    %1313 = vmatpush1.bf16.msra.mxu0 %v1294
    %1314 = vmatprep.subr.bf16.mxu0 0
    %1315 = vmatpush1.bf16.msra.mxu0 %v1293
    %1316 = vmatprep.subr.bf16.mxu0 0
    %1317 = vmatpush1.bf16.msra.mxu0 %v1292
    %1318 = vmatprep.subr.bf16.mxu0 0
    %1319 = vmatpush1.bf16.msra.mxu0 %v1291
    %1320 = vmatprep.subr.bf16.mxu0 0
    %1321 = vmatpush1.bf16.msra.mxu0 %v1290
    %1322 = vmatprep.subr.bf16.mxu0 0
    %1323 = vmatpush2.bf16.msra.mxu0 0
    %1324 = vmatprep.subr.bf16.mxu0 0
    %1325 = vmatpush2.bf16.msra.mxu0 0
    %1326 = vmatprep.subr.bf16.mxu0 0
    %1327 = vmatpush2.bf16.msra.mxu0 0
    %1328 = vmatprep.subr.bf16.mxu0 0
    %1329 = vmatpush2.bf16.msra.mxu0 0
    %1330 = vmatprep.subr.bf16.mxu0 0
    %1331 = vmatpush2.bf16.msra.mxu0 0
    %1332 = vmatprep.subr.bf16.mxu0 0
    %1333 = vmatpush2.bf16.msra.mxu0 0
    %1334 = vmatprep.subr.bf16.mxu0 0
    %1335 = vmatpush2.bf16.msra.mxu0 0
    %1336 = vmatprep.subr.bf16.mxu0 0
    %1337 = vmatpush2.bf16.msra.mxu0 0
    %1338 = vmatprep.mubr.bf16.mxu0 0
    %1339 = vmatmul.mubr.bf16.gmra.mxu0 %v1234
    %v1340 = vpop.f32.mrf.mxu0
    %v1341 = vadd.f32 %v1256, %v1340
    %v1342 = vpop.f32.mrf.mxu0
    %v1343 = vpop.f32.mrf.mxu0
    %v1344 = vpop.f32.mrf.mxu0
    %1345 = vdwg.mxu0
    %1346 = vst [vmem:[#allocation7] sm:$0x3] %v1341
    // Predicated region
    $region38: #{conv_ccf_forward.1} parent=1 // pred_check
      _
    $region39: #{conv_ccf_forward.1} parent=1 // pred_check_branch
      %1348 = sbr.rel (0) target = $region41
    $region40: #{conv_ccf_forward.1} parent=1 // pred_region
      %s1350 = ssub.s32 32, 32
      %1351 = vsyncadd [#allocation4], %s1350
      %s1353 = sshll.u32 [#allocation7], 4
      %s1354 = int_to_ptr.vmem [resolvable:$true] %s1353
      %1356 = dma.vmem_to_hbm [thread:$0]  %s1354, 32, %s7, [#allocation4]
    $region41: #{conv_ccf_forward.1} parent=1 // pred_fallthru
      _
    // Predicated region
    $region42: #{conv_ccf_forward.1} parent=1 // pred_check
      _
    $region43: #{conv_ccf_forward.1} parent=1 // pred_check_branch
      %1358 = sbr.rel (0) target = $region45
    $region44: #{conv_ccf_forward.1} parent=1 // pred_region
      %1359 = dma.done [#allocation4], 32
    $region45: #{conv_ccf_forward.1} parent=1 // pred_fallthru
      _
    %1360 = vsyncpa [#allocation3], 1
    %1361 = vsyncpa [#allocation6], 1
    %1362 = vsyncpa [#allocation4], 1

</llo_original>
